<compile_context>
chip_gen: v5e
topology: v5e:2x2
jax: 0.10.0
libtpu: 0.0.40
codegen_flags: <defaults>
</compile_context>

<pallas_src>
import functools

import jax
import jax.numpy as jnp
from jax import lax
from jax.experimental import pallas as pl
from jax.experimental.pallas import tpu as pltpu


def _round_up(x, m):
    return ((x + m - 1) // m) * m


def _critic_kernel(s_ref, w1_ref, b1_ref, w2_ref, b2_ref, w3r_ref, b3_ref,
                   o_ref, *, chunk):
    """Fused 3-layer MLP forward for one batch tile (all operands VMEM-resident).

    s_ref : [TB, state_dim]             streamed batch tile (input dtype)
    o_ref : [1, nchunks, chunk] f32     lane-dense output rows for this tile
    """
    tb = s_ref.shape[0]
    nchunks = tb // chunk                       # static

    def compute_chunk(c, row_start):
        # Layers 1/2 on the MXU: operands cast to the weights' dtype (bf16 by
        # default), accumulation / bias / ReLU in f32.
        x = s_ref[pl.ds(row_start, chunk), :].astype(w1_ref.dtype)
        h1 = jnp.dot(x, w1_ref[...], preferred_element_type=jnp.float32) + b1_ref[...]
        h1 = jnp.maximum(h1, 0.0)
        h2 = jnp.dot(h1.astype(w2_ref.dtype), w2_ref[...],
                     preferred_element_type=jnp.float32) + b2_ref[...]
        h2 = jnp.maximum(h2, 0.0)               # [chunk, 128] f32

        # Layer 3 (out_features = 1): contract over the 128 hidden lanes so the
        # result is a lane-dense [1, chunk] row (no 1-lane masked column stores).
        v = lax.dot_general(w3r_ref[...], h2, (((1,), (1,)), ((), ())),
                            preferred_element_type=jnp.float32) + b3_ref[...]
        # Per-chunk store at a dynamic sublane index of the (1, nchunks, chunk) block.
        o_ref[:, pl.ds(c, 1), :] = v.reshape(1, 1, chunk).astype(o_ref.dtype)

    if nchunks == 1:
        compute_chunk(0, 0)
    else:
        # Unrolled inner loop: bounds h1/h2 live ranges to one chunk at large TB.
        def body(c, carry):
            compute_chunk(c, pl.multiple_of(c * chunk, chunk))
            return carry
        lax.fori_loop(0, nchunks, body, 0, unroll=True)


@functools.partial(jax.jit, static_argnames=("compute_dtype", "block_b"))
def critic_forward(s, params, *, compute_dtype=jnp.bfloat16, block_b=2048):
    """s: [B, state_dim] -> V(s): [B, 1] float32.

    compute_dtype controls the MXU operand dtype for layers 1/2 (bf16 default:
    single-pass MXU on v5e/v6e/v7x).  Accumulation, biases, ReLU and the final
    layer are always f32.  Pass s already in bf16 upstream to also halve its HBM read.
    """
    w1, b1, w2, b2, w3, b3 = params
    B, state_dim = s.shape
    hidden = w1.shape[1]

    # ---- batch tiling -----------------------------------------------------------
    if B < 256:
        # Tiny batch: one full-array tile (full-dim blocks are exempt from the (8,128)
        # divisibility rule); no padding anywhere.
        num_tiles, TB = 1, B
    else:
        # >=2 grid steps so both v7x TensorCores get work; TB a multiple of 128 so the
        # lane-dense output blocks stay aligned.  No wrapper pad: the boundary tile is
        # masked by Pallas, and output lanes >= B are sliced off below.
        num_tiles = max(2, pl.cdiv(B, block_b))
        TB = _round_up(pl.cdiv(B, num_tiles), 128)
        num_tiles = pl.cdiv(B, TB)

    # Inner chunk size (divides TB by construction).
    if TB <= 512:
        chunk = TB
    elif TB % 512 == 0:
        chunk = 512
    elif TB % 256 == 0:
        chunk = 256
    else:
        chunk = 128
    nchunks = TB // chunk

    # ---- parameter packing (weights cast once; biases / final layer stay f32) ----
    w1_c = w1.astype(compute_dtype)
    w2_c = w2.astype(compute_dtype)
    b1_f = jnp.reshape(b1, (1, hidden)).astype(jnp.float32)
    b2_f = jnp.reshape(b2, (1, hidden)).astype(jnp.float32)
    w3_row = jnp.reshape(w3, (1, hidden)).astype(jnp.float32)
    b3_11 = jnp.reshape(b3, (1, 1)).astype(jnp.float32)

    # Weights/biases: constant block index -> fetched once, VMEM-resident across steps.
    def resident(shape):
        return pl.BlockSpec(shape, lambda i: (0,) * len(shape))

    out = pl.pallas_call(
        functools.partial(_critic_kernel, chunk=chunk),
        out_shape=jax.ShapeDtypeStruct((num_tiles, nchunks, chunk), jnp.float32),
        grid=(num_tiles,),
        in_specs=[
            pl.BlockSpec((TB, state_dim), lambda i: (i, 0)),     # streamed batch tile
            resident(w1_c.shape), resident(b1_f.shape),
            resident(w2_c.shape), resident(b2_f.shape),
            resident(w3_row.shape), resident(b3_11.shape),
        ],
        out_specs=pl.BlockSpec((1, nchunks, chunk), lambda i: (i, 0, 0)),
        compiler_params=pltpu.CompilerParams(
            dimension_semantics=("parallel",)),                  # v7x: shard batch over 2 TCs
    )(s, w1_c, b1_f, w2_c, b2_f, w3_row, b3_11)

    # Flat index (tile, chunk, lane) -> batch row; slice off boundary padding (tiny).
    return out.reshape(-1)[:B].reshape(B, 1)


def init_params(key, state_dim, hidden=128):
    """Deterministic init mimicking nn.Linear default (U(-1/sqrt(in), 1/sqrt(in)))."""
    def linear(k, fan_in, fan_out):
        kw, kb = jax.random.split(k)
        bound = 1.0 / jnp.sqrt(jnp.float32(fan_in))
        w = jax.random.uniform(kw, (fan_in, fan_out), jnp.float32, -bound, bound)
        b = jax.random.uniform(kb, (1, fan_out), jnp.float32, -bound, bound)
        return w, b

    k1, k2, k3 = jax.random.split(key, 3)
    w1, b1 = linear(k1, state_dim, hidden)
    w2, b2 = linear(k2, hidden, hidden)
    w3, b3 = linear(k3, hidden, 1)
    return (w1, b1, w2, b2, w3, b3)


def critic_reference(s, params):
    """Plain-JAX reference of the same forward pass (for sanity checking)."""
    w1, b1, w2, b2, w3, b3 = params
    h1 = jnp.maximum(s @ w1 + b1, 0.0)
    h2 = jnp.maximum(h1 @ w2 + b2, 0.0)
    return h2 @ w3 + b3


if __name__ == "__main__":
    key = jax.random.PRNGKey(0)
    k_params, k_small, k_big = jax.random.split(key, 3)

    state_dim = 32
    params = init_params(k_params, state_dim)

    # 1) Small batch (B=2, as the module docstring implies): single full-array tile,
    #    default bf16 MXU-operand path (f32 accumulation).
    s_small = jax.random.normal(k_small, (2, state_dim), dtype=jnp.float32)
    v_small = jax.block_until_ready(critic_forward(s_small, params))
    ref_small = critic_reference(s_small, params)
    assert v_small.shape == (2, 1), f"bad output shape {v_small.shape}"
    assert jnp.allclose(v_small, ref_small, atol=5e-2, rtol=5e-2), "bf16 small-batch mismatch"

    # 2) Multi-tile batch (B=600): 2 grid steps (TB=384), a partial boundary tile with
    #    no wrapper padding, the inner chunk loop (3 x 128 rows) and lane-dense output.
    s_big = jax.random.normal(k_big, (600, state_dim), dtype=jnp.float32)
    v_big = jax.block_until_ready(critic_forward(s_big, params))
    ref_big = critic_reference(s_big, params)
    assert v_big.shape == (600, 1), f"bad output shape {v_big.shape}"
    assert jnp.allclose(v_big, ref_big, atol=5e-2, rtol=5e-2), "bf16 tiled-batch mismatch"

    # 3) f32 MXU-operand compatibility path: tighter tolerance vs the plain-JAX reference.
    v_f32 = jax.block_until_ready(
        critic_forward(s_big, params, compute_dtype=jnp.float32))
    assert v_f32.shape == (600, 1), f"bad output shape {v_f32.shape}"
    assert jnp.allclose(v_f32, ref_big, atol=5e-3, rtol=5e-3), "f32 tiled-batch mismatch"

    print("KERNEL_OK")
</pallas_src>

<mosaic_0001>
module attributes {stable_mosaic.version = 11 : i64} {
  func.func @_critic_kernel(%arg0: i32, %arg1: memref<2x32xf32, #tpu.memory_space<vmem>>, %arg2: memref<32x128xbf16, #tpu.memory_space<vmem>>, %arg3: memref<1x128xf32, #tpu.memory_space<vmem>>, %arg4: memref<128x128xbf16, #tpu.memory_space<vmem>>, %arg5: memref<1x128xf32, #tpu.memory_space<vmem>>, %arg6: memref<1x128xf32, #tpu.memory_space<vmem>>, %arg7: memref<1x1xf32, #tpu.memory_space<vmem>>, %arg8: memref<1x1x2xf32, #tpu.memory_space<vmem>>) attributes {dimension_semantics = [#tpu.dimension_semantics<parallel>], iteration_bounds = array<i64: 1>, scalar_prefetch = 0 : i64, scratch_operands = 0 : i64, tpu.core_type = #tpu.core_type<tc>, window_params = [{transform_indices = @transform_0, window_bounds = array<i64: 2, 32>}, {pipeline_mode = #tpu.pipeline_mode<synchronous>, transform_indices = @transform_1, window_bounds = array<i64: 32, 128>}, {pipeline_mode = #tpu.pipeline_mode<synchronous>, transform_indices = @transform_2, window_bounds = array<i64: 1, 128>}, {pipeline_mode = #tpu.pipeline_mode<synchronous>, transform_indices = @transform_3, window_bounds = array<i64: 128, 128>}, {pipeline_mode = #tpu.pipeline_mode<synchronous>, transform_indices = @transform_4, window_bounds = array<i64: 1, 128>}, {pipeline_mode = #tpu.pipeline_mode<synchronous>, transform_indices = @transform_5, window_bounds = array<i64: 1, 128>}, {pipeline_mode = #tpu.pipeline_mode<synchronous>, transform_indices = @transform_6, window_bounds = array<i64: 1, 1>}, {transform_indices = @transform_7, window_bounds = array<i64: 1, 1, 2>}]} {
    %c0 = arith.constant 0 : index
    %c0_0 = arith.constant 0 : index
    %0 = vector.load %arg1[%c0, %c0_0] : memref<2x32xf32, #tpu.memory_space<vmem>>, vector<2x32xf32>
    %1 = arith.truncf %0 : vector<2x32xf32> to vector<2x32xbf16>
    %c0_1 = arith.constant 0 : index
    %c0_2 = arith.constant 0 : index
    %2 = vector.load %arg2[%c0_1, %c0_2] : memref<32x128xbf16, #tpu.memory_space<vmem>>, vector<32x128xbf16>
    %cst = arith.constant dense<0.000000e+00> : vector<2x128xf32>
    %3 = tpu.matmul %1, %2, %cst {dimension_numbers = #tpu.dot_dimension_numbers<[1], [0], [0], [1], [0, 0, 1, 1], [], []>} : vector<2x32xbf16>, vector<32x128xbf16>, vector<2x128xf32> -> vector<2x128xf32>
    %c0_3 = arith.constant 0 : index
    %c0_4 = arith.constant 0 : index
    %4 = vector.load %arg3[%c0_3, %c0_4] : memref<1x128xf32, #tpu.memory_space<vmem>>, vector<1x128xf32>
    %5 = vector.broadcast %4 : vector<1x128xf32> to vector<2x128xf32>
    %6 = arith.addf %3, %5 : vector<2x128xf32>
    %cst_5 = arith.constant 0.000000e+00 : f32
    %7 = vector.broadcast %cst_5 : f32 to vector<2x128xf32>
    %8 = arith.maximumf %6, %7 : vector<2x128xf32>
    %9 = arith.truncf %8 : vector<2x128xf32> to vector<2x128xbf16>
    %c0_6 = arith.constant 0 : index
    %c0_7 = arith.constant 0 : index
    %10 = vector.load %arg4[%c0_6, %c0_7] : memref<128x128xbf16, #tpu.memory_space<vmem>>, vector<128x128xbf16>
    %cst_8 = arith.constant dense<0.000000e+00> : vector<2x128xf32>
    %11 = tpu.matmul %9, %10, %cst_8 {dimension_numbers = #tpu.dot_dimension_numbers<[1], [0], [0], [1], [0, 0, 1, 1], [], []>} : vector<2x128xbf16>, vector<128x128xbf16>, vector<2x128xf32> -> vector<2x128xf32>
    %c0_9 = arith.constant 0 : index
    %c0_10 = arith.constant 0 : index
    %12 = vector.load %arg5[%c0_9, %c0_10] : memref<1x128xf32, #tpu.memory_space<vmem>>, vector<1x128xf32>
    %13 = vector.broadcast %12 : vector<1x128xf32> to vector<2x128xf32>
    %14 = arith.addf %11, %13 : vector<2x128xf32>
    %cst_11 = arith.constant 0.000000e+00 : f32
    %15 = vector.broadcast %cst_11 : f32 to vector<2x128xf32>
    %16 = arith.maximumf %14, %15 : vector<2x128xf32>
    %c0_12 = arith.constant 0 : index
    %c0_13 = arith.constant 0 : index
    %17 = vector.load %arg6[%c0_12, %c0_13] : memref<1x128xf32, #tpu.memory_space<vmem>>, vector<1x128xf32>
    %cst_14 = arith.constant dense<0.000000e+00> : vector<1x2xf32>
    %18 = tpu.matmul %17, %16, %cst_14 {dimension_numbers = #tpu.dot_dimension_numbers<[1], [1], [0], [0], [0, 0, 1, 0], [], []>} : vector<1x128xf32>, vector<2x128xf32>, vector<1x2xf32> -> vector<1x2xf32>
    %c0_15 = arith.constant 0 : index
    %c0_16 = arith.constant 0 : index
    %19 = vector.load %arg7[%c0_15, %c0_16] : memref<1x1xf32, #tpu.memory_space<vmem>>, vector<1x1xf32>
    %20 = vector.broadcast %19 : vector<1x1xf32> to vector<1x2xf32>
    %21 = arith.addf %18, %20 : vector<1x2xf32>
    %22 = vector.shape_cast %21 : vector<1x2xf32> to vector<1x1x2xf32>
    %c0_17 = arith.constant 0 : index
    %c0_18 = arith.constant 0 : index
    %c0_19 = arith.constant 0 : index
    %23 = vector.load %arg8[%c0_17, %c0_18, %c0_19] : memref<1x1x2xf32, #tpu.memory_space<vmem>>, vector<1x1x2xf32>
    tpu.vector_store %arg8[%c0_17, %c0_18, %c0_19], %22 {strides = array<i32>} : memref<1x1x2xf32, #tpu.memory_space<vmem>>, vector<1x1x2xf32>,
    return
  }
  func.func @transform_0(%arg0: i32) -> (i32, i32) {
    %c0_i32 = arith.constant 0 : i32
    %c0_i32_0 = arith.constant 0 : i32
    return %arg0, %c0_i32 : i32, i32
  }
  func.func @transform_1(%arg0: i32) -> (i32, i32) {
    %c0_i32 = arith.constant 0 : i32
    %c0_i32_0 = arith.constant 0 : i32
    %c0_i32_1 = arith.constant 0 : i32
    return %c0_i32, %c0_i32_0 : i32, i32
  }
  func.func @transform_2(%arg0: i32) -> (i32, i32) {
    %c0_i32 = arith.constant 0 : i32
    %c0_i32_0 = arith.constant 0 : i32
    %c0_i32_1 = arith.constant 0 : i32
    return %c0_i32, %c0_i32_0 : i32, i32
  }
  func.func @transform_3(%arg0: i32) -> (i32, i32) {
    %c0_i32 = arith.constant 0 : i32
    %c0_i32_0 = arith.constant 0 : i32
    %c0_i32_1 = arith.constant 0 : i32
    return %c0_i32, %c0_i32_0 : i32, i32
  }
  func.func @transform_4(%arg0: i32) -> (i32, i32) {
    %c0_i32 = arith.constant 0 : i32
    %c0_i32_0 = arith.constant 0 : i32
    %c0_i32_1 = arith.constant 0 : i32
    return %c0_i32, %c0_i32_0 : i32, i32
  }
  func.func @transform_5(%arg0: i32) -> (i32, i32) {
    %c0_i32 = arith.constant 0 : i32
    %c0_i32_0 = arith.constant 0 : i32
    %c0_i32_1 = arith.constant 0 : i32
    return %c0_i32, %c0_i32_0 : i32, i32
  }
  func.func @transform_6(%arg0: i32) -> (i32, i32) {
    %c0_i32 = arith.constant 0 : i32
    %c0_i32_0 = arith.constant 0 : i32
    %c0_i32_1 = arith.constant 0 : i32
    return %c0_i32, %c0_i32_0 : i32, i32
  }
  func.func @transform_7(%arg0: i32) -> (i32, i32, i32) {
    %c0_i32 = arith.constant 0 : i32
    %c0_i32_0 = arith.constant 0 : i32
    %c0_i32_1 = arith.constant 0 : i32
    return %arg0, %c0_i32, %c0_i32_0 : i32, i32, i32
  }
}

</mosaic_0001>

<llo_original>
// kernel: critic_forward.1
$region0: #{critic_forward.1}
  #allocation0 [shape = 'u32[]', space=smem, size = 0x4, offset = 0x4, fixed_abs, tag = 'smem constant byte address 0x4 - core index']
  #allocation1 [shape = 'u32[72,128]{1,0:T(1,128)}', space=vmem, size = 0x9000, scoped, tag = 'internal scratch']
  #allocation2 [shape = 'f32[1,1]{1,0:T(1,128)S(1)}', space=vmem, size = 0x200, scoped, tag = 'scoped memory for critic_forward.1']
  %s0 = inlined_call_operand.vmem [shape: f32[2,32], index: 0, kind: input, shape index: {}]
  %s1 = inlined_call_operand.vmem [shape: bf16[32,128], index: 1, kind: input, shape index: {}]
  %s2 = inlined_call_operand.vmem [shape: f32[1,128], index: 2, kind: input, shape index: {}]
  %s3 = inlined_call_operand.vmem [shape: bf16[128,128], index: 3, kind: input, shape index: {}]
  %s4 = inlined_call_operand.vmem [shape: f32[1,128], index: 4, kind: input, shape index: {}]
  %s5 = inlined_call_operand.vmem [shape: f32[1,128], index: 5, kind: input, shape index: {}]
  %s6 = inlined_call_operand.<no memory space> [shape: f32[1,1], index: 6, kind: input, shape index: {}]
  %s7 = inlined_call_operand.hbm [shape: f32[1,1,2], index: 7, kind: output, shape index: {}]
  %s8 = sld [smem:[#allocation0]]
  $region38: #{critic_forward.1} parent=0
    _
  %s10 = ssub.s32 1, %s8
  %s11 = scalar_select 0, %s10, %s8
  %v12 = vstv %s6
  %13 = vst [vmem:[#allocation2] sm:$0x1] %v12
  $region1: #{critic_forward.1} parent=0
    #allocation3 [shape = 'u8[512]{0}', space=vmem, size = 0x400, scoped, tag = 'output window, operand 0, single buffered']
    #allocation4 [shape = 's32[1]{0}', space=sflag, size = 0x4, scoped, tag = 'scoped memory for critic_forward.1']
    %14 = vsyncpa [#allocation4], 0
    // Predicated region
    $region2: #{critic_forward.1} parent=1 // pred_check
      _
    $region3: #{critic_forward.1} parent=1 // pred_check_branch
      %16 = sbr.rel (0) target = $region5
    $region4: #{critic_forward.1} parent=1 // pred_region
      _
    $region5: #{critic_forward.1} parent=1 // pred_fallthru
      _
    // Predicated region
    $region6: #{critic_forward.1} parent=1 // pred_check
      _
    $region7: #{critic_forward.1} parent=1 // pred_check_branch
      %18 = sbr.rel (0) target = $region9
    $region8: #{critic_forward.1} parent=1 // pred_region
      _
    $region9: #{critic_forward.1} parent=1 // pred_fallthru
      _
    // Predicated region
    $region10: #{critic_forward.1} parent=1 // pred_check
      _
    $region11: #{critic_forward.1} parent=1 // pred_check_branch
      %20 = sbr.rel (0) target = $region13
    $region12: #{critic_forward.1} parent=1 // pred_region
      _
    $region13: #{critic_forward.1} parent=1 // pred_fallthru
      _
    // Predicated region
    $region14: #{critic_forward.1} parent=1 // pred_check
      _
    $region15: #{critic_forward.1} parent=1 // pred_check_branch
      %22 = sbr.rel (0) target = $region17
    $region16: #{critic_forward.1} parent=1 // pred_region
      _
    $region17: #{critic_forward.1} parent=1 // pred_fallthru
      _
    // Predicated region
    $region18: #{critic_forward.1} parent=1 // pred_check
      _
    $region19: #{critic_forward.1} parent=1 // pred_check_branch
      %24 = sbr.rel (0) target = $region21
    $region20: #{critic_forward.1} parent=1 // pred_region
      _
    $region21: #{critic_forward.1} parent=1 // pred_fallthru
      _
    // Predicated region
    $region22: #{critic_forward.1} parent=1 // pred_check
      _
    $region23: #{critic_forward.1} parent=1 // pred_check_branch
      %26 = sbr.rel (0) target = $region25
    $region24: #{critic_forward.1} parent=1 // pred_region
      _
    $region25: #{critic_forward.1} parent=1 // pred_fallthru
      _
    // Predicated region
    $region26: #{critic_forward.1} parent=1 // pred_check
      _
    $region27: #{critic_forward.1} parent=1 // pred_check_branch
      %28 = sbr.rel (0) target = $region29
    $region28: #{critic_forward.1} parent=1 // pred_region
      _
    $region29: #{critic_forward.1} parent=1 // pred_fallthru
      _
    %v30 = vld [vmem:[%s0] sm:$0x3]
    %v31 = vpack.c.bf16 %v30, %v30
    %v32 = vld [vmem:[%s1] sm:$0xf]
    %v33 = vld [vmem:[%s1 + $0x4] sm:$0xf]
    %v34 = vld [vmem:[%s1 + $0x8] sm:$0xf]
    %v35 = vld [vmem:[%s1 + $0xc] sm:$0xf]
    %v36 = vld [vmem:[%s2] sm:$0x1]
    %v38 = vperm.slane %v36, 0
    %v44 = vunpack.c.l.b16 %v32
    %v45 = vunpack.c.l.b16 %v33
    %v46 = vunpack.c.l.b16 %v34
    %v47 = vunpack.c.l.b16 %v35
    %v48 = vpack.c.b16 %v45, %v44
    %v49 = vpack.c.b16 %v47, %v46
    %vm52 = vcmask 261120
    %v54 = vsel %vm52, %v31, 0
    %56 = vmatpush.bf16.msra.mxu0 0
    %57 = vmatpush.bf16.msra.mxu0 0
    %58 = vmatpush.bf16.msra.mxu0 0
    %59 = vmatpush.bf16.msra.mxu0 0
    %60 = vmatpush.bf16.msra.mxu0 0
    %61 = vmatpush.bf16.msra.mxu0 0
    %62 = vmatpush.bf16.msra.mxu0 %v49
    %63 = vmatpush.bf16.msra.mxu0 %v48
    %64 = vmatmul.bf16.gmra.mxu0 %v54
    %v65 = vpop.f32.mrf.mxu0
    %v66 = vadd.f32 %v38, %v65
    %v67 = vpop.f32.mrf.mxu0
    %68 = vdwg.mxu0
    %v69 = vmax.f32 %v66, 0.0
    %v70 = vpack.c.bf16 %v69, %v69
    %v71 = vld [vmem:[%s3] sm:$0xf]
    %v72 = vld [vmem:[%s3 + $0x4] sm:$0xf]
    %v73 = vld [vmem:[%s3 + $0x8] sm:$0xf]
    %v74 = vld [vmem:[%s3 + $0xc] sm:$0xf]
    %v75 = vld [vmem:[%s3 + $0x10] sm:$0xf]
    %v76 = vld [vmem:[%s3 + $0x14] sm:$0xf]
    %v77 = vld [vmem:[%s3 + $0x18] sm:$0xf]
    %v78 = vld [vmem:[%s3 + $0x1c] sm:$0xf]
    %v79 = vld [vmem:[%s3 + $0x20] sm:$0xf]
    %v80 = vld [vmem:[%s3 + $0x24] sm:$0xf]
    %v81 = vld [vmem:[%s3 + $0x28] sm:$0xf]
    %v82 = vld [vmem:[%s3 + $0x2c] sm:$0xf]
    %v83 = vld [vmem:[%s3 + $0x30] sm:$0xf]
    %v84 = vld [vmem:[%s3 + $0x34] sm:$0xf]
    %v85 = vld [vmem:[%s3 + $0x38] sm:$0xf]
    %v86 = vld [vmem:[%s3 + $0x3c] sm:$0xf]
    %v87 = vld [vmem:[%s4] sm:$0x1]
    %v89 = vperm.slane %v87, 0
    %v107 = vunpack.c.l.b16 %v71
    %v108 = vunpack.c.l.b16 %v72
    %v109 = vunpack.c.l.b16 %v73
    %v110 = vunpack.c.l.b16 %v74
    %v111 = vunpack.c.l.b16 %v75
    %v112 = vunpack.c.l.b16 %v76
    %v113 = vunpack.c.l.b16 %v77
    %v114 = vunpack.c.l.b16 %v78
    %v115 = vunpack.c.l.b16 %v79
    %v116 = vunpack.c.l.b16 %v80
    %v117 = vunpack.c.l.b16 %v81
    %v118 = vunpack.c.l.b16 %v82
    %v119 = vunpack.c.l.b16 %v83
    %v120 = vunpack.c.l.b16 %v84
    %v121 = vunpack.c.l.b16 %v85
    %v122 = vunpack.c.l.b16 %v86
    %v123 = vpack.c.b16 %v108, %v107
    %v124 = vpack.c.b16 %v110, %v109
    %v125 = vpack.c.b16 %v112, %v111
    %v126 = vpack.c.b16 %v114, %v113
    %v127 = vpack.c.b16 %v116, %v115
    %v128 = vpack.c.b16 %v118, %v117
    %v129 = vpack.c.b16 %v120, %v119
    %v130 = vpack.c.b16 %v122, %v121
    %139 = vmatpush.bf16.msra.mxu0 %v130
    %140 = vmatpush.bf16.msra.mxu0 %v129
    %141 = vmatpush.bf16.msra.mxu0 %v128
    %142 = vmatpush.bf16.msra.mxu0 %v127
    %143 = vmatpush.bf16.msra.mxu0 %v126
    %144 = vmatpush.bf16.msra.mxu0 %v125
    %145 = vmatpush.bf16.msra.mxu0 %v124
    %146 = vmatpush.bf16.msra.mxu0 %v123
    %147 = vmatmul.bf16.gmra.mxu0 %v70
    %v148 = vpop.f32.mrf.mxu0
    %v149 = vadd.f32 %v89, %v148
    %v150 = vpop.f32.mrf.mxu0
    %151 = vdwg.mxu0
    %v152 = vmax.f32 %v149, 0.0
    %v153 = vld [vmem:[%s5] sm:$0x1]
    %v154 = vld [vmem:[#allocation2] sm:$0x1]
    %156 = vset.pattern.permute.xlu0 0
    %157 = vperm.xlu0 %156, %v154
    %v158 = vpop.permute.xlu0 %157
    %v160 = vperm.slane %v158, 0
    %161 = vmatpush.xpose.msra.mxu0 0.0
    %162 = vmatpush.xpose.msra.mxu0 0.0
    %163 = vmatpush.xpose.msra.mxu0 0.0
    %164 = vmatpush.xpose.msra.mxu0 0.0
    %165 = vmatpush.xpose.msra.mxu0 0.0
    %166 = vmatpush.xpose.msra.mxu0 0.0
    %167 = vmatpush.xpose.msra.mxu0 0.0
    %168 = vmatpush.xpose.msra.mxu0 0.0
    %169 = vmatpush.xpose.msra.mxu0 0.0
    %170 = vmatpush.xpose.msra.mxu0 0.0
    %171 = vmatpush.xpose.msra.mxu0 0.0
    %172 = vmatpush.xpose.msra.mxu0 0.0
    %173 = vmatpush.xpose.msra.mxu0 0.0
    %174 = vmatpush.xpose.msra.mxu0 0.0
    %175 = vmatpush.xpose.msra.mxu0 0.0
    %176 = vmatpush.xpose.msra.mxu0 %v152
    %177 = vmatmul.f32.gmra.mxu0 %v153
    %v178 = vpop.f32.mrf.mxu0
    %v179 = vadd.f32 %v160, %v178
    %180 = vdwg.mxu0
    %vm181 = vcmask 8192
    %182 = vst.msk [vmem:[#allocation3] sm:$0x1] %vm181, %v179
    // Predicated region
    $region30: #{critic_forward.1} parent=1 // pred_check
      _
    $region31: #{critic_forward.1} parent=1 // pred_check_branch
      %184 = sbr.rel (0) target = $region33
    $region32: #{critic_forward.1} parent=1 // pred_region
      %186 = vsyncadd [#allocation4], 0
      %s188 = sshll.u32 [#allocation3], 4
      %s189 = int_to_ptr.vmem [resolvable:$true] %s188
      %s190 = sshll.u32 %s7, 4
      %s191 = int_to_ptr.hbm [resolvable:$true] %s190
      %193 = dma.vmem_to_hbm [thread:$0]  %s189, 16, %s191, [#allocation4]
    $region33: #{critic_forward.1} parent=1 // pred_fallthru
      _
    // Predicated region
    $region34: #{critic_forward.1} parent=1 // pred_check
      _
    $region35: #{critic_forward.1} parent=1 // pred_check_branch
      %195 = sbr.rel (0) target = $region37
    $region36: #{critic_forward.1} parent=1 // pred_region
      %197 = dma.done [#allocation4], 16
    $region37: #{critic_forward.1} parent=1 // pred_fallthru
      _
    %198 = vsyncpa [#allocation4], 1

</llo_original>
